<compile_context>
chip_gen: v7x
topology: tpu7x:2x2x1
jax: 0.10.0
libtpu: 0.0.40
codegen_flags: <defaults>
</compile_context>

<pallas_src>
import functools

import jax
import jax.numpy as jnp
from jax import lax
from jax.experimental import pallas as pl
from jax.experimental.pallas import tpu as pltpu


def _round_up(x, m):
    return -(-x // m) * m


def _vmem_capacity_bytes():
    """Physical VMEM of the current chip; conservative fallback (v7x per-TC)."""
    try:
        info = pltpu.get_tpu_info()
        cap = getattr(info, "vmem_capacity_bytes", None)
        if cap:
            return int(cap)
    except Exception:
        pass
    return 64 * 1024 * 1024


def _default_pairwise_preadd():
    """Enable the bf16 pairwise pre-add only on chips with a bf16 VPU (v6e+)."""
    try:
        kind = jax.devices()[0].device_kind.lower()
    except Exception:
        return False
    return not any(tag in kind for tag in ("v2", "v3", "v4", "v5"))


def _adapter_kernel(x_ref, gamma_ref, beta_ref, w_ref, b_ref, o_ref, acc_ref,
                    *, mean_pool, n_true, n_tile, last_local, pairwise):
    # x_ref:     (B_tile, n_tile, D)  native dtype
    # gamma_ref: (1, D)   beta_ref: (1, D)
    # w_ref:     (D, C_pad)  b_ref: (1, C_pad)
    # o_ref:     (B_tile, 1, C_pad)
    # acc_ref:   (B_tile, D) f32 scratch (persists across the token grid axis)

    def finalize(pooled_f32):
        # LayerNorm over D, eps=1e-6 (matches nn.LayerNorm), then linear head.
        mu = jnp.mean(pooled_f32, axis=-1, keepdims=True)
        diff = pooled_f32 - mu
        var = jnp.mean(diff * diff, axis=-1, keepdims=True)
        inv = lax.rsqrt(var + 1e-6)
        normed = diff * inv
        normed = (normed * gamma_ref[...].astype(jnp.float32)
                  + beta_ref[...].astype(jnp.float32))
        out = jnp.dot(normed, w_ref[...].astype(jnp.float32),
                      preferred_element_type=jnp.float32)
        out = out + b_ref[...].astype(jnp.float32)
        o_ref[:, 0, :] = out.astype(o_ref.dtype)

    if mean_pool:
        k = pl.program_id(1)
        nk = pl.num_programs(1)

        @pl.when(k == 0)
        def _init():
            acc_ref[...] = jnp.zeros_like(acc_ref)

        # Steady state: per-chunk token sums (pure VPU, hides under the DMA
        # stream). For bf16/f16, one pairwise add in the native dtype first
        # halves the convert+add count per incoming vreg (v6e/v7x VALU relief).
        @pl.when(k < nk - 1)
        def _accumulate_full_chunk():
            x = x_ref[...]
            if pairwise:
                h = n_tile // 2
                x = x[:, :h, :] + x[:, h:, :]
            acc_ref[...] += jnp.sum(x.astype(jnp.float32), axis=1)

        # Last chunk: mask the N remainder, then finalize (mean + LN + matmul).
        @pl.when(k == nk - 1)
        def _accumulate_tail_and_finalize():
            x = x_ref[...].astype(jnp.float32)
            tok = lax.broadcasted_iota(jnp.int32, x.shape, 1) + k * n_tile
            x = jnp.where(tok < n_true, x, 0.0)
            acc_ref[...] += jnp.sum(x, axis=1)
            finalize(acc_ref[...] * (1.0 / float(n_true)))
    else:
        # Last-token path: the index_map already fetched the block that
        # contains token N-1; pick it out without any wrapper-side HBM copy.
        pooled = x_ref[...][:, last_local, :].astype(jnp.float32)
        finalize(pooled)


def prepare_adapter_params(gamma, beta, head_w, head_b):
    """One-time layout prep (item 7): transpose W to (D, C), pad C to a
    lane-dense multiple of 128, reshape vectors to 2-D. Call once at init."""
    D = gamma.shape[0]
    C = head_w.shape[0]
    C_pad = _round_up(C, 128)
    w_t = head_w.T                               # (D, C): matmul-friendly layout
    b2 = head_b.reshape(1, C)
    if C_pad != C:
        w_t = jnp.pad(w_t, ((0, 0), (0, C_pad - C)))
        b2 = jnp.pad(b2, ((0, 0), (0, C_pad - C)))
    return {
        "gamma": gamma.reshape(1, D),
        "beta": beta.reshape(1, D),
        "w_t": w_t,                              # (D, C_pad)
        "b": b2,                                 # (1, C_pad)
        "num_classes": int(C),
    }


def linear_output_adapter(encoder_tokens, params, *, use_mean_pooling=True,
                          n_tile=None, out_dtype=jnp.float32,
                          pairwise_preadd=None):
    """encoder_tokens: (B, N, D); params: output of prepare_adapter_params()."""
    gamma2, beta2 = params["gamma"], params["beta"]
    w_t, b2 = params["w_t"], params["b"]
    C = int(params["num_classes"])

    B, N, D = encoder_tokens.shape
    C_pad = w_t.shape[1]
    itemsize = jnp.dtype(encoder_tokens.dtype).itemsize
    narrow = itemsize < 4

    # --- batch tiling (parallel axis). >=2 batch tiles whenever B >= 2 so the
    #     "parallel" axis shards across both v7x TensorCores. The token tile is
    #     re-derived from the byte budget, so the per-step block size (and thus
    #     step count / fixed overhead) is unchanged on single-TC chips.
    B_tile = 8 if B > 8 else max(1, (B + 1) // 2)
    grid_b = pl.cdiv(B, B_tile)

    # --- per-generation VMEM budgeting (items 1/2) ---
    vmem_cap = _vmem_capacity_bytes()
    budget = int(vmem_cap * 0.70)
    param_bytes = sum(int(a.size) * jnp.dtype(a.dtype).itemsize
                      for a in (gamma2, beta2, w_t, b2))
    out_block_bytes = B_tile * C_pad * jnp.dtype(out_dtype).itemsize
    fixed_bytes = 2 * param_bytes + 2 * out_block_bytes + (2 << 20)
    # Two pipeline buffers for x; for sub-32-bit inputs also reserve room for a
    # worst-case materialized f32 temp of the cast+reduce (see TODO above).
    divisor = 2 + ((4 // itemsize) if narrow else 0)
    per_buf_cap = ((16 << 20) * itemsize // 4) if narrow else (16 << 20)
    per_buf = max(1 << 20, (budget - fixed_bytes) // divisor)
    per_buf = int(min(per_buf, per_buf_cap))

    if pairwise_preadd is None:
        pairwise_preadd = narrow and _default_pairwise_preadd()

    if use_mean_pooling:
        if n_tile is None:
            per_token = max(1, B_tile * D * itemsize)
            n_tile = max(8, (per_buf // per_token) // 16 * 16)
        else:
            n_tile = int(n_tile)
            if n_tile < N:
                n_tile = _round_up(n_tile, 8)
        if n_tile >= N:
            n_tile = N          # single reduction step; block == full token dim
        grid_n = pl.cdiv(N, n_tile)
        tok_map = lambda b, k: (b, k, 0)
        last_local = 0
        pairwise = (bool(pairwise_preadd)
                    and encoder_tokens.dtype in (jnp.bfloat16, jnp.float16)
                    and grid_n > 1 and n_tile % 16 == 0)
    else:
        # Fetch only the small block containing the last token.
        n_tile = 8 if N >= 8 else N
        grid_n = 1
        last_blk = (N - 1) // n_tile
        tok_map = lambda b, k, _blk=last_blk: (b, _blk, 0)
        last_local = (N - 1) % n_tile
        pairwise = False

    x_block_bytes = B_tile * n_tile * D * itemsize
    x_f32_temp = B_tile * n_tile * D * 4 if narrow else 0
    vmem_limit = (2 * x_block_bytes + x_f32_temp + 2 * param_bytes
                  + 2 * out_block_bytes
                  + _round_up(B_tile, 8) * _round_up(D, 128) * 4
                  + (4 << 20))
    vmem_limit = int(min(max(vmem_limit, 8 << 20), int(vmem_cap * 0.9)))

    kernel = functools.partial(_adapter_kernel,
                               mean_pool=use_mean_pooling,
                               n_true=N, n_tile=n_tile, last_local=last_local,
                               pairwise=pairwise)

    const_map_2d = lambda b, k: (0, 0)   # params: fetched once, VMEM-resident

    n_read = N if use_mean_pooling else n_tile
    cost = pl.CostEstimate(
        flops=int(B * n_read * D + 2 * B * D * C_pad + 10 * B * D),
        transcendentals=0,
        bytes_accessed=int(B * n_read * D * itemsize + param_bytes
                           + B * C_pad * jnp.dtype(out_dtype).itemsize))

    out_padded = pl.pallas_call(
        kernel,
        out_shape=jax.ShapeDtypeStruct((B, 1, C_pad), out_dtype),
        grid=(grid_b, grid_n),
        in_specs=[
            pl.BlockSpec((B_tile, n_tile, D), tok_map),
            pl.BlockSpec((1, D), const_map_2d),
            pl.BlockSpec((1, D), const_map_2d),
            pl.BlockSpec((D, C_pad), const_map_2d),
            pl.BlockSpec((1, C_pad), const_map_2d),
        ],
        out_specs=pl.BlockSpec((B_tile, 1, C_pad), lambda b, k: (b, 0, 0)),
        scratch_shapes=[pltpu.VMEM((B_tile, D), jnp.float32)],
        compiler_params=pltpu.CompilerParams(
            dimension_semantics=("parallel", "arbitrary"),
            vmem_limit_bytes=vmem_limit),
        cost_estimate=cost,
    )(encoder_tokens, gamma2, beta2, w_t, b2)

    out = out_padded[:, 0, :]
    return out[:, :C] if C_pad != C else out


def init_params(key, dim_tokens_enc, num_classes, init_scale=1.0):
    """LayerNorm: weight=1, bias=0; Linear: trunc_normal(std=0.02), bias=0;
       then head weight/bias scaled by init_scale (matches _init_weights)."""
    gamma = jnp.ones((dim_tokens_enc,), jnp.float32)
    beta = jnp.zeros((dim_tokens_enc,), jnp.float32)
    head_w = 0.02 * jax.random.truncated_normal(
        key, -2.0, 2.0, (num_classes, dim_tokens_enc), jnp.float32)
    head_b = jnp.zeros((num_classes,), jnp.float32)
    return gamma, beta, head_w * init_scale, head_b * init_scale


if __name__ == "__main__":
    B, N, D, C = 2, 20, 32, 16
    key = jax.random.PRNGKey(0)
    k_x, k_p = jax.random.split(key)

    encoder_tokens = jax.random.normal(k_x, (B, N, D), jnp.float32)
    gamma, beta, head_w, head_b = init_params(k_p, D, C, init_scale=1.0)
    params = prepare_adapter_params(gamma, beta, head_w, head_b)

    def ref_head(pooled):
        mu = pooled.mean(-1, keepdims=True)
        var = ((pooled - mu) ** 2).mean(-1, keepdims=True)
        y = (pooled - mu) / jnp.sqrt(var + 1e-6) * gamma + beta
        return y @ head_w.T + head_b

    # (1) Mean-pooling, f32. Force n_tile=8 so the grid runs 3 reduction steps
    #     including a masked remainder block (20 % 8 = 4) and a 2-wide parallel
    #     batch axis (B_tile=1) exercising the dual-TC sharding path.
    out = linear_output_adapter(encoder_tokens, params,
                                use_mean_pooling=True, n_tile=8)
    out = jax.block_until_ready(out)
    ref_mean = ref_head(encoder_tokens.mean(axis=1))
    assert out.shape == (B, C)
    assert jnp.allclose(out, ref_mean, atol=1e-4, rtol=1e-4), "mean-pool mismatch"

    # (2) Last-token path (use_mean_pooling=False) — no wrapper-side HBM slice.
    out_last = linear_output_adapter(encoder_tokens, params,
                                     use_mean_pooling=False)
    out_last = jax.block_until_ready(out_last)
    ref_last = ref_head(encoder_tokens[:, -1, :])
    assert jnp.allclose(out_last, ref_last, atol=1e-4, rtol=1e-4), "last-token mismatch"

    # (3) bf16 input with the pairwise native-dtype pre-add forced on
    #     (n_tile=16 -> one full 16-token chunk + masked 4-token tail).
    x_bf16 = encoder_tokens.astype(jnp.bfloat16)
    out_bf = linear_output_adapter(x_bf16, params, use_mean_pooling=True,
                                   n_tile=16, pairwise_preadd=True)
    out_bf = jax.block_until_ready(out_bf)
    ref_bf = ref_head(x_bf16.astype(jnp.float32).mean(axis=1))
    assert jnp.allclose(out_bf, ref_bf, atol=2e-2, rtol=2e-2), "bf16 mismatch"

    print("KERNEL_OK")
</pallas_src>

<mosaic_0001>
module attributes {stable_mosaic.version = 11 : i64} {
  func.func @_adapter_kernel(%arg0: i32, %arg1: i32, %arg2: memref<1x8x32xf32, #tpu.memory_space<vmem>>, %arg3: memref<1x32xf32, #tpu.memory_space<vmem>>, %arg4: memref<1x32xf32, #tpu.memory_space<vmem>>, %arg5: memref<32x128xf32, #tpu.memory_space<vmem>>, %arg6: memref<1x128xf32, #tpu.memory_space<vmem>>, %arg7: memref<1x1x128xf32, #tpu.memory_space<vmem>>, %arg8: memref<1x32xf32, #tpu.memory_space<vmem>>) attributes {dimension_semantics = [#tpu.dimension_semantics<parallel>, #tpu.dimension_semantics<arbitrary>], iteration_bounds = array<i64: 2, 3>, scalar_prefetch = 0 : i64, scratch_operands = 1 : i64, tpu.core_type = #tpu.core_type<tc>, window_params = [{transform_indices = @transform_0, window_bounds = array<i64: 1, 8, 32>}, {pipeline_mode = #tpu.pipeline_mode<synchronous>, transform_indices = @transform_1, window_bounds = array<i64: 1, 32>}, {pipeline_mode = #tpu.pipeline_mode<synchronous>, transform_indices = @transform_2, window_bounds = array<i64: 1, 32>}, {pipeline_mode = #tpu.pipeline_mode<synchronous>, transform_indices = @transform_3, window_bounds = array<i64: 32, 128>}, {pipeline_mode = #tpu.pipeline_mode<synchronous>, transform_indices = @transform_4, window_bounds = array<i64: 1, 128>}, {transform_indices = @transform_5, window_bounds = array<i64: 1, 1, 128>}]} {
    %c0_i32 = arith.constant 0 : i32
    %0 = arith.cmpi eq, %arg1, %c0_i32 : i32
    %1 = arith.extui %0 : i1 to i32
    %c0_i32_0 = arith.constant 0 : i32
    %2 = arith.cmpi ne, %1, %c0_i32_0 : i32
    scf.if %2 {
      %cst = arith.constant 0.000000e+00 : f32
      %9 = vector.broadcast %cst : f32 to vector<1x32xf32>
      %c0 = arith.constant 0 : index
      %c0_4 = arith.constant 0 : index
      %10 = vector.load %arg8[%c0, %c0_4] : memref<1x32xf32, #tpu.memory_space<vmem>>, vector<1x32xf32>
      tpu.vector_store %arg8[%c0, %c0_4], %9 {strides = array<i32>} : memref<1x32xf32, #tpu.memory_space<vmem>>, vector<1x32xf32>,
    } else {
    }
    %c2_i32 = arith.constant 2 : i32
    %3 = arith.cmpi slt, %arg1, %c2_i32 : i32
    %4 = arith.extui %3 : i1 to i32
    %c0_i32_1 = arith.constant 0 : i32
    %5 = arith.cmpi ne, %4, %c0_i32_1 : i32
    scf.if %5 {
      %c0 = arith.constant 0 : index
      %c0_4 = arith.constant 0 : index
      %c0_5 = arith.constant 0 : index
      %9 = vector.load %arg2[%c0, %c0_4, %c0_5] : memref<1x8x32xf32, #tpu.memory_space<vmem>>, vector<1x8x32xf32>
      %c0_6 = arith.constant 0 : index
      %c0_7 = arith.constant 0 : index
      %10 = vector.load %arg8[%c0_6, %c0_7] : memref<1x32xf32, #tpu.memory_space<vmem>>, vector<1x32xf32>
      %cst = arith.constant dense<0.000000e+00> : vector<1x32xf32>
      %11 = vector.multi_reduction <add>, %9, %cst [1] : vector<1x8x32xf32> to vector<1x32xf32>
      %12 = arith.addf %10, %11 : vector<1x32xf32>
      %c0_8 = arith.constant 0 : index
      %c0_9 = arith.constant 0 : index
      %13 = vector.load %arg8[%c0_8, %c0_9] : memref<1x32xf32, #tpu.memory_space<vmem>>, vector<1x32xf32>
      tpu.vector_store %arg8[%c0_8, %c0_9], %12 {strides = array<i32>} : memref<1x32xf32, #tpu.memory_space<vmem>>, vector<1x32xf32>,
    } else {
    }
    %c2_i32_2 = arith.constant 2 : i32
    %6 = arith.cmpi eq, %arg1, %c2_i32_2 : i32
    %7 = arith.extui %6 : i1 to i32
    %c0_i32_3 = arith.constant 0 : i32
    %8 = arith.cmpi ne, %7, %c0_i32_3 : i32
    scf.if %8 {
      %c0 = arith.constant 0 : index
      %c0_4 = arith.constant 0 : index
      %c0_5 = arith.constant 0 : index
      %9 = vector.load %arg2[%c0, %c0_4, %c0_5] : memref<1x8x32xf32, #tpu.memory_space<vmem>>, vector<1x8x32xf32>
      %10 = tpu.iota {dimensions = array<i32: 1>} : vector<1x8x32xi32>
      %c8_i32 = arith.constant 8 : i32
      %11 = arith.muli %arg1, %c8_i32 : i32
      %12 = vector.broadcast %11 : i32 to vector<1x8x32xi32>
      %13 = arith.addi %10, %12 : vector<1x8x32xi32>
      %c20_i32 = arith.constant 20 : i32
      %14 = vector.broadcast %c20_i32 : i32 to vector<1x8x32xi32>
      %15 = arith.cmpi slt, %13, %14 : vector<1x8x32xi32>
      %cst = arith.constant 0.000000e+00 : f32
      %16 = vector.broadcast %cst : f32 to vector<1x8x32xf32>
      %17 = arith.select %15, %9, %16 : vector<1x8x32xi1>, vector<1x8x32xf32>
      %c0_6 = arith.constant 0 : index
      %c0_7 = arith.constant 0 : index
      %18 = vector.load %arg8[%c0_6, %c0_7] : memref<1x32xf32, #tpu.memory_space<vmem>>, vector<1x32xf32>
      %cst_8 = arith.constant dense<0.000000e+00> : vector<1x32xf32>
      %19 = vector.multi_reduction <add>, %17, %cst_8 [1] : vector<1x8x32xf32> to vector<1x32xf32>
      %20 = arith.addf %18, %19 : vector<1x32xf32>
      %c0_9 = arith.constant 0 : index
      %c0_10 = arith.constant 0 : index
      %21 = vector.load %arg8[%c0_9, %c0_10] : memref<1x32xf32, #tpu.memory_space<vmem>>, vector<1x32xf32>
      tpu.vector_store %arg8[%c0_9, %c0_10], %20 {strides = array<i32>} : memref<1x32xf32, #tpu.memory_space<vmem>>, vector<1x32xf32>,
      %c0_11 = arith.constant 0 : index
      %c0_12 = arith.constant 0 : index
      %22 = vector.load %arg8[%c0_11, %c0_12] : memref<1x32xf32, #tpu.memory_space<vmem>>, vector<1x32xf32>
      %cst_13 = arith.constant 5.000000e-02 : f32
      %23 = vector.broadcast %cst_13 : f32 to vector<1x32xf32>
      %24 = arith.mulf %22, %23 : vector<1x32xf32>
      %cst_14 = arith.constant dense<0.000000e+00> : vector<1xf32>
      %25 = vector.multi_reduction <add>, %24, %cst_14 [1] : vector<1x32xf32> to vector<1xf32>
      %26 = vector.shape_cast %25 : vector<1xf32> to vector<1x1xf32>
      %cst_15 = arith.constant 3.200000e+01 : f32
      %27 = vector.broadcast %cst_15 : f32 to vector<1x1xf32>
      %28 = arith.divf %26, %27 : vector<1x1xf32>
      %29 = vector.broadcast %28 : vector<1x1xf32> to vector<1x32xf32>
      %30 = arith.subf %24, %29 : vector<1x32xf32>
      %31 = arith.mulf %30, %30 : vector<1x32xf32>
      %cst_16 = arith.constant dense<0.000000e+00> : vector<1xf32>
      %32 = vector.multi_reduction <add>, %31, %cst_16 [1] : vector<1x32xf32> to vector<1xf32>
      %33 = vector.shape_cast %32 : vector<1xf32> to vector<1x1xf32>
      %cst_17 = arith.constant 3.200000e+01 : f32
      %34 = vector.broadcast %cst_17 : f32 to vector<1x1xf32>
      %35 = arith.divf %33, %34 : vector<1x1xf32>
      %cst_18 = arith.constant 9.99999997E-7 : f32
      %36 = vector.broadcast %cst_18 : f32 to vector<1x1xf32>
      %37 = arith.addf %35, %36 : vector<1x1xf32>
      %38 = math.rsqrt %37 : vector<1x1xf32>
      %39 = vector.broadcast %38 : vector<1x1xf32> to vector<1x32xf32>
      %40 = arith.mulf %30, %39 : vector<1x32xf32>
      %c0_19 = arith.constant 0 : index
      %c0_20 = arith.constant 0 : index
      %41 = vector.load %arg3[%c0_19, %c0_20] : memref<1x32xf32, #tpu.memory_space<vmem>>, vector<1x32xf32>
      %42 = arith.mulf %40, %41 : vector<1x32xf32>
      %c0_21 = arith.constant 0 : index
      %c0_22 = arith.constant 0 : index
      %43 = vector.load %arg4[%c0_21, %c0_22] : memref<1x32xf32, #tpu.memory_space<vmem>>, vector<1x32xf32>
      %44 = arith.addf %42, %43 : vector<1x32xf32>
      %c0_23 = arith.constant 0 : index
      %c0_24 = arith.constant 0 : index
      %45 = vector.load %arg5[%c0_23, %c0_24] : memref<32x128xf32, #tpu.memory_space<vmem>>, vector<32x128xf32>
      %cst_25 = arith.constant dense<0.000000e+00> : vector<1x128xf32>
      %46 = tpu.matmul %44, %45, %cst_25 {dimension_numbers = #tpu.dot_dimension_numbers<[1], [0], [0], [1], [0, 0, 1, 1], [], []>} : vector<1x32xf32>, vector<32x128xf32>, vector<1x128xf32> -> vector<1x128xf32>
      %c0_26 = arith.constant 0 : index
      %c0_27 = arith.constant 0 : index
      %47 = vector.load %arg6[%c0_26, %c0_27] : memref<1x128xf32, #tpu.memory_space<vmem>>, vector<1x128xf32>
      %48 = arith.addf %46, %47 : vector<1x128xf32>
      %c0_28 = arith.constant 0 : index
      %c0_29 = arith.constant 0 : index
      %c0_30 = arith.constant 0 : index
      %49 = vector.load %arg7[%c0_28, %c0_29, %c0_30] : memref<1x1x128xf32, #tpu.memory_space<vmem>>, vector<1x1x128xf32>
      %50 = vector.shape_cast %49 : vector<1x1x128xf32> to vector<1x128xf32>
      %51 = vector.shape_cast %48 : vector<1x128xf32> to vector<1x1x128xf32>
      tpu.vector_store %arg7[%c0_28, %c0_29, %c0_30], %51 {strides = array<i32>} : memref<1x1x128xf32, #tpu.memory_space<vmem>>, vector<1x1x128xf32>,
    } else {
    }
    return
  }
  func.func @transform_0(%arg0: i32, %arg1: i32) -> (i32, i32, i32) {
    %c0_i32 = arith.constant 0 : i32
    %c0_i32_0 = arith.constant 0 : i32
    return %arg0, %arg1, %c0_i32 : i32, i32, i32
  }
  func.func @transform_1(%arg0: i32, %arg1: i32) -> (i32, i32) {
    %c0_i32 = arith.constant 0 : i32
    %c0_i32_0 = arith.constant 0 : i32
    %c0_i32_1 = arith.constant 0 : i32
    return %c0_i32, %c0_i32_0 : i32, i32
  }
  func.func @transform_2(%arg0: i32, %arg1: i32) -> (i32, i32) {
    %c0_i32 = arith.constant 0 : i32
    %c0_i32_0 = arith.constant 0 : i32
    %c0_i32_1 = arith.constant 0 : i32
    return %c0_i32, %c0_i32_0 : i32, i32
  }
  func.func @transform_3(%arg0: i32, %arg1: i32) -> (i32, i32) {
    %c0_i32 = arith.constant 0 : i32
    %c0_i32_0 = arith.constant 0 : i32
    %c0_i32_1 = arith.constant 0 : i32
    return %c0_i32, %c0_i32_0 : i32, i32
  }
  func.func @transform_4(%arg0: i32, %arg1: i32) -> (i32, i32) {
    %c0_i32 = arith.constant 0 : i32
    %c0_i32_0 = arith.constant 0 : i32
    %c0_i32_1 = arith.constant 0 : i32
    return %c0_i32, %c0_i32_0 : i32, i32
  }
  func.func @transform_5(%arg0: i32, %arg1: i32) -> (i32, i32, i32) {
    %c0_i32 = arith.constant 0 : i32
    %c0_i32_0 = arith.constant 0 : i32
    %c0_i32_1 = arith.constant 0 : i32
    return %arg0, %c0_i32, %c0_i32_0 : i32, i32, i32
  }
}

</mosaic_0001>

<llo_original>
// kernel: tpu_custom_call.1
$region0: #{tpu_custom_call.1}
  #allocation0 [shape = 'u32[]', space=smem, size = 0x4, offset = 0x4, fixed_abs, tag = 'smem constant byte address 0x4 - core index']
  #allocation1 [shape = 'u32[144,128]{1,0:T(1,128)}', space=vmem, size = 0x12000, scoped, tag = 'internal scratch']
  #allocation2 [shape = 'f32[1,32]{1,0:T(1,128)}', space=vmem, size = 0x200, scoped, tag = 'scratch operand']
  %s0 = inlined_call_operand.vmem [shape: f32[2,20,32], index: 0, kind: input, shape index: {}]
  %s1 = inlined_call_operand.vmem [shape: f32[1,32], index: 1, kind: input, shape index: {}]
  %s2 = inlined_call_operand.vmem [shape: f32[1,32], index: 2, kind: input, shape index: {}]
  %s3 = inlined_call_operand.vmem [shape: f32[32,128], index: 3, kind: input, shape index: {}]
  %s4 = inlined_call_operand.vmem [shape: f32[1,128], index: 4, kind: input, shape index: {}]
  %s5 = inlined_call_operand.hbm [shape: f32[2,1,128], index: 5, kind: output, shape index: {}]
  %s6 = sld [smem:[#allocation0]]
  $region65: #{tpu_custom_call.1} parent=0
    _
  %s8 = ssub.s32 1, %s6
  %s9 = scalar_select 0, %s8, %s6
  $region1: #{tpu_custom_call.1} parent=0
    #allocation3 [shape = 'u8[1024]{0}', space=vmem, size = 0x400, scoped, tag = 'output window, operand 0']
    #allocation4 [shape = 's32[2]{0}', space=sflag, size = 0x8, scoped, tag = 'scoped memory for tpu_custom_call.1']
    %10 = vsyncpa [#allocation4], 0
    %s11 = scalar_lea.sflag [#allocation4], 1
    %12 = vsyncpa %s11, 0
    loop: start=0, step=1, limit=8
    $region2: #{tpu_custom_call.1} parent=1 // loop_pre_header
      _
    $region3: #{tpu_custom_call.1} parent=1 // loop_header
      %s14 = sphi 0, %s18
      %p15 = scmp.ge.s32.totalorder %s14, 8
      %s21 = sphi 0, %s33
      %s22 = sphi 0, %s29
      %s23 = sphi 0, %s21
      %s24 = sphi 0, %s22
      %s25 = sphi 0, %s23
      %s26 = sphi 0, %s24
      %s38 = sphi 0, %s40
      %s41 = sphi 0, %s38
      %s42 = sphi 0, %s41
      %s58 = sphi 0, %s42
      %s62 = sphi 0, %s62
      %s64 = sphi 0, %s62
      %s65 = sphi 0, %s64
      %s79 = sphi 0, %s65
      %s83 = sphi 0, %s83
      %s85 = sphi 0, %s83
      %s86 = sphi 0, %s85
      %s100 = sphi 0, %s86
      %s104 = sphi 0, %s104
      %s106 = sphi 0, %s104
      %s107 = sphi 0, %s106
      %s121 = sphi 0, %s107
      %s125 = sphi 0, %s125
      %s127 = sphi 0, %s125
      %s128 = sphi 0, %s127
      %s142 = sphi 0, %s128
      %s148 = sphi 0, %s150
      %s151 = sphi 0, %s148
      %s152 = sphi 0, %s151
      %s168 = sphi 0, %s152
    $region4: #{tpu_custom_call.1} parent=1 // loop_header_branch
      %17 = sbr.rel (%p15) target = $region8
    $region5: #{tpu_custom_call.1} parent=1 // loop_body
      %s19 = ssub.s32 %s14, 1
      %s20 = ssub.s32 %s14, 2
      %s27 = sadd.s32 1, %s22
      %p28 = scmp.ge.s32.totalorder %s27, 3
      %s29 = scalar_select %p28, 0, %s27
      %s30 = sadd.s32 1, %s21
      %s31 = scalar_select %p28, %s30, %s21
      %p32 = scmp.ge.s32.totalorder %s31, 2
      %s33 = scalar_select %p32, 0, %s31
      %s34 = ssub.s32 %s21, %s33
      %s35 = ssub.s32 %s22, %s29
      %s36 = sor.u32 %s34, %s35
      %p37 = scmp.eq.s32.totalorder %s36, 0
      %s39 = sadd.s32 %s38, 1
      %s40 = scalar_select %p37, %s38, %s39
      %p43 = pneg %p37
      %p44 = scmp.eq.s32.totalorder %s14, 5
      %p45 = por %p43, %p44
      %p46 = scmp.ne.s32.totalorder %s38, %s41
      %p47 = scmp.eq.s32.totalorder %s14, 0
      %p48 = por %p46, %p47
      %p49 = scmp.ne.s32.totalorder %s38, %s41
      %p50 = scmp.eq.s32.totalorder %s19, 5
      %p51 = por %p49, %p50
      %p52 = scmp.ne.s32.totalorder %s41, %s42
      %p53 = scmp.eq.s32.totalorder %s19, 0
      %p54 = por %p52, %p53
      %p55 = scmp.ne.s32.totalorder %s41, %s42
      %p56 = scmp.eq.s32.totalorder %s20, 5
      %p57 = por %p55, %p56
      %p59 = scmp.ne.s32.totalorder %s42, %s58
      %p60 = scmp.eq.s32.totalorder %s20, 0
      %p61 = por %p59, %p60
      %s63 = sadd.s32 %s62, 1
      %p66 = scmp.eq.s32.totalorder %s14, 5
      %p67 = scmp.ne.s32.totalorder %s62, %s64
      %p68 = scmp.eq.s32.totalorder %s14, 0
      %p69 = por %p67, %p68
      %p70 = scmp.ne.s32.totalorder %s62, %s64
      %p71 = scmp.eq.s32.totalorder %s19, 5
      %p72 = por %p70, %p71
      %p73 = scmp.ne.s32.totalorder %s64, %s65
      %p74 = scmp.eq.s32.totalorder %s19, 0
      %p75 = por %p73, %p74
      %p76 = scmp.ne.s32.totalorder %s64, %s65
      %p77 = scmp.eq.s32.totalorder %s20, 5
      %p78 = por %p76, %p77
      %p80 = scmp.ne.s32.totalorder %s65, %s79
      %p81 = scmp.eq.s32.totalorder %s20, 0
      %p82 = por %p80, %p81
      %s84 = sadd.s32 %s83, 1
      %p87 = scmp.eq.s32.totalorder %s14, 5
      %p88 = scmp.ne.s32.totalorder %s83, %s85
      %p89 = scmp.eq.s32.totalorder %s14, 0
      %p90 = por %p88, %p89
      %p91 = scmp.ne.s32.totalorder %s83, %s85
      %p92 = scmp.eq.s32.totalorder %s19, 5
      %p93 = por %p91, %p92
      %p94 = scmp.ne.s32.totalorder %s85, %s86
      %p95 = scmp.eq.s32.totalorder %s19, 0
      %p96 = por %p94, %p95
      %p97 = scmp.ne.s32.totalorder %s85, %s86
      %p98 = scmp.eq.s32.totalorder %s20, 5
      %p99 = por %p97, %p98
      %p101 = scmp.ne.s32.totalorder %s86, %s100
      %p102 = scmp.eq.s32.totalorder %s20, 0
      %p103 = por %p101, %p102
      %s105 = sadd.s32 %s104, 1
      %p108 = scmp.eq.s32.totalorder %s14, 5
      %p109 = scmp.ne.s32.totalorder %s104, %s106
      %p110 = scmp.eq.s32.totalorder %s14, 0
      %p111 = por %p109, %p110
      %p112 = scmp.ne.s32.totalorder %s104, %s106
      %p113 = scmp.eq.s32.totalorder %s19, 5
      %p114 = por %p112, %p113
      %p115 = scmp.ne.s32.totalorder %s106, %s107
      %p116 = scmp.eq.s32.totalorder %s19, 0
      %p117 = por %p115, %p116
      %p118 = scmp.ne.s32.totalorder %s106, %s107
      %p119 = scmp.eq.s32.totalorder %s20, 5
      %p120 = por %p118, %p119
      %p122 = scmp.ne.s32.totalorder %s107, %s121
      %p123 = scmp.eq.s32.totalorder %s20, 0
      %p124 = por %p122, %p123
      %s126 = sadd.s32 %s125, 1
      %p129 = scmp.eq.s32.totalorder %s14, 5
      %p130 = scmp.ne.s32.totalorder %s125, %s127
      %p131 = scmp.eq.s32.totalorder %s14, 0
      %p132 = por %p130, %p131
      %p133 = scmp.ne.s32.totalorder %s125, %s127
      %p134 = scmp.eq.s32.totalorder %s19, 5
      %p135 = por %p133, %p134
      %p136 = scmp.ne.s32.totalorder %s127, %s128
      %p137 = scmp.eq.s32.totalorder %s19, 0
      %p138 = por %p136, %p137
      %p139 = scmp.ne.s32.totalorder %s127, %s128
      %p140 = scmp.eq.s32.totalorder %s20, 5
      %p141 = por %p139, %p140
      %p143 = scmp.ne.s32.totalorder %s128, %s142
      %p144 = scmp.eq.s32.totalorder %s20, 0
      %p145 = por %p143, %p144
      %s146 = ssub.s32 %s21, %s33
      %p147 = scmp.eq.s32.totalorder %s146, 0
      %s149 = sadd.s32 %s148, 1
      %s150 = scalar_select %p147, %s148, %s149
      %p153 = pneg %p147
      %p154 = scmp.eq.s32.totalorder %s14, 5
      %p155 = por %p153, %p154
      %p156 = scmp.ne.s32.totalorder %s148, %s151
      %p157 = scmp.eq.s32.totalorder %s14, 0
      %p158 = por %p156, %p157
      %p159 = scmp.ne.s32.totalorder %s148, %s151
      %p160 = scmp.eq.s32.totalorder %s19, 5
      %p161 = por %p159, %p160
      %p162 = scmp.ne.s32.totalorder %s151, %s152
      %p163 = scmp.eq.s32.totalorder %s19, 0
      %p164 = por %p162, %p163
      %p165 = scmp.ne.s32.totalorder %s151, %s152
      %p166 = scmp.eq.s32.totalorder %s20, 5
      %p167 = por %p165, %p166
      %p169 = scmp.ne.s32.totalorder %s152, %s168
      %p170 = scmp.eq.s32.totalorder %s20, 0
      %p171 = por %p169, %p170
      %p172 = scmp.le.s32.totalorder 1, %s14
      %p173 = scmp.lt.s32.totalorder %s14, 7
      %p174 = pnand %p172, %p173
      %p175 = pneg %p174
      // Predicated region
      $region9: #{tpu_custom_call.1} parent=5 // pred_check
        _
      $region10: #{tpu_custom_call.1} parent=5 // pred_check_branch
        %177 = sbr.rel (%p174) target = $region12
      $region11: #{tpu_custom_call.1} parent=5 // pred_region
        %s178 = ssub.s32 %s14, 1
        // Predicated region
        $region13: #{tpu_custom_call.1} parent=11 // pred_check
          %p179 = pneg %p75
        $region14: #{tpu_custom_call.1} parent=11 // pred_check_branch
          %181 = sbr.rel (%p179) target = $region16
        $region15: #{tpu_custom_call.1} parent=11 // pred_region
          _
        $region16: #{tpu_custom_call.1} parent=11 // pred_fallthru
          _
        // Predicated region
        $region17: #{tpu_custom_call.1} parent=11 // pred_check
          %p182 = pneg %p96
        $region18: #{tpu_custom_call.1} parent=11 // pred_check_branch
          %184 = sbr.rel (%p182) target = $region20
        $region19: #{tpu_custom_call.1} parent=11 // pred_region
          _
        $region20: #{tpu_custom_call.1} parent=11 // pred_fallthru
          _
        // Predicated region
        $region21: #{tpu_custom_call.1} parent=11 // pred_check
          %p185 = pneg %p117
        $region22: #{tpu_custom_call.1} parent=11 // pred_check_branch
          %187 = sbr.rel (%p185) target = $region24
        $region23: #{tpu_custom_call.1} parent=11 // pred_region
          _
        $region24: #{tpu_custom_call.1} parent=11 // pred_fallthru
          _
        // Predicated region
        $region25: #{tpu_custom_call.1} parent=11 // pred_check
          %p188 = pneg %p138
        $region26: #{tpu_custom_call.1} parent=11 // pred_check_branch
          %190 = sbr.rel (%p188) target = $region28
        $region27: #{tpu_custom_call.1} parent=11 // pred_region
          _
        $region28: #{tpu_custom_call.1} parent=11 // pred_fallthru
          _
      $region12: #{tpu_custom_call.1} parent=5 // pred_fallthru
        _
      %p191 = scmp.lt.s32.totalorder %s14, 6
      // Predicated region
      $region29: #{tpu_custom_call.1} parent=5 // pred_check
        %p192 = pneg %p191
      $region30: #{tpu_custom_call.1} parent=5 // pred_check_branch
        %194 = sbr.rel (%p192) target = $region32
      $region31: #{tpu_custom_call.1} parent=5 // pred_region
        // Predicated region
        $region33: #{tpu_custom_call.1} parent=31 // pred_check
          %p195 = pneg %p48
        $region34: #{tpu_custom_call.1} parent=31 // pred_check_branch
          %197 = sbr.rel (%p195) target = $region36
        $region35: #{tpu_custom_call.1} parent=31 // pred_region
          %p198 = scmp.lt.s32.totalorder %s21, 1
          %s199 = scalar_select %p198, %s21, 1
          %p200 = scmp.lt.s32.totalorder %s22, 2
          %s201 = scalar_select %p200, %s22, 2
          %s202 = smul.addr %s199, 3
          %s203 = sadd.s32 %s201, %s202
          %s204 = smul.addr %s203, 8
          %s205 = scalar_lea.vmem %s0, %s204
        $region36: #{tpu_custom_call.1} parent=31 // pred_fallthru
          _
      $region32: #{tpu_custom_call.1} parent=5 // pred_fallthru
        _
      %p206 = scmp.le.s32.totalorder 1, %s14
      %p207 = scmp.lt.s32.totalorder %s14, 7
      %p208 = pnand %p206, %p207
      %p209 = pneg %p208
      // Predicated region
      $region37: #{tpu_custom_call.1} parent=5 // pred_check
        _
      $region38: #{tpu_custom_call.1} parent=5 // pred_check_branch
        %211 = sbr.rel (%p208) target = $region40
      $region39: #{tpu_custom_call.1} parent=5 // pred_region
        %s212 = ssub.s32 %s14, 1
        %p213 = scmp.lt.s32.totalorder %s23, 1
        %s214 = scalar_select %p213, %s23, 1
        %p215 = scmp.lt.s32.totalorder %s24, 2
        %s216 = scalar_select %p215, %s24, 2
        %s217 = smul.addr %s214, 3
        %s218 = sadd.s32 %s216, %s217
        %s219 = smul.addr %s218, 8
        %s220 = scalar_lea.vmem %s0, %s219
        %p221 = pneg %p54
        %p222 = pneg %p51
        %p223 = pneg %p75
        %p224 = pneg %p72
        %p225 = pneg %p96
        %p226 = pneg %p93
        %p227 = pneg %p117
        %p228 = pneg %p114
        %p229 = pneg %p138
        %p230 = pneg %p135
        %p231 = pneg %p164
        %p232 = pneg %p161
        %s233 = sand.u32 %s151, 1
        %s234 = scalar_lea.sflag [#allocation4], %s233
        %s235 = sand.u32 %s151, 1
        %s236 = scalar_lea.vmem [#allocation3], %s235
        %p237 = scmp.lt.s32.totalorder %s23, 1
        %s238 = scalar_select %p237, %s23, 1
        %p239 = scmp.lt.s32.totalorder %s24, 2
        %s240 = scalar_select %p239, %s24, 2
        %s241 = smul.addr %s238, 3
        %s242 = sadd.s32 %s240, %s241
        %s243 = smul.addr %s242, 8
        %s244 = scalar_lea.vmem %s0, %s243
        %p245 = scmp.eq.s32.totalorder %s24, 0
        // Predicated region
        $region41: #{tpu_custom_call.1} parent=39 // pred_check
          %p246 = pneg %p245
        $region42: #{tpu_custom_call.1} parent=39 // pred_check_branch
          %248 = sbr.rel (%p246) target = $region44
        $region43: #{tpu_custom_call.1} parent=39 // pred_region
          %vm249 = vcmask 253952
          %250 = vst.msk [vmem:[#allocation2] sm:$0x1] %vm249, 0.0
        $region44: #{tpu_custom_call.1} parent=39 // pred_fallthru
          _
        %p251 = scmp.lt.s32.totalorder %s24, 2
        // Predicated region
        $region45: #{tpu_custom_call.1} parent=39 // pred_check
          %p252 = pneg %p251
        $region46: #{tpu_custom_call.1} parent=39 // pred_check_branch
          %254 = sbr.rel (%p252) target = $region48
        $region47: #{tpu_custom_call.1} parent=39 // pred_region
          %v255 = vld [vmem:[%s244] sm:$0xff]
          %v256 = vld [vmem:[#allocation2] sm:$0x1]
          %vm257 = vcmask 261120
          %v258 = vsel %vm257, %v255, 0.0
          %v259 = vrot.slane %v258, 4
          %v260 = vadd.f32 %v258, %v259
          %v261 = vrot.slane %v260, 2
          %v262 = vadd.f32 %v260, %v261
          %v263 = vrot.slane %v262, 1
          %v264 = vadd.f32 %v262, %v263
          %v265 = vadd.f32 %v256, %v264
          %vm266 = vcmask 253952
          %267 = vst.msk [vmem:[#allocation2] sm:$0x1] %vm266, %v265
        $region48: #{tpu_custom_call.1} parent=39 // pred_fallthru
          _
        %p268 = scmp.eq.s32.totalorder %s24, 2
        // Predicated region
        $region49: #{tpu_custom_call.1} parent=39 // pred_check
          %p269 = pneg %p268
        $region50: #{tpu_custom_call.1} parent=39 // pred_check_branch
          %271 = sbr.rel (%p269) target = $region52
        $region51: #{tpu_custom_call.1} parent=39 // pred_region
          %v272 = vld [vmem:[%s244] sm:$0xff]
          %v273 = vlaneseq
          %v274 = vshrl.u32 %v273, 7
          %s275 = smul.u32 %s24, 8
          %v276 = vstv %s275
          %v277 = vadd.s32 %v274, %v276
          %vm278 = vcmp.lt.s32.totalorder %v277, 20
          %v279 = vsel %vm278, %v272, 0.0
          %v280 = vld [vmem:[#allocation2] sm:$0x1]
          %vm281 = vcmask 261120
          %v282 = vsel %vm281, %v279, 0.0
          %v283 = vrot.slane %v282, 4
          %v284 = vadd.f32 %v282, %v283
          %v285 = vrot.slane %v284, 2
          %v286 = vadd.f32 %v284, %v285
          %v287 = vrot.slane %v286, 1
          %v288 = vadd.f32 %v286, %v287
          %v289 = vadd.f32 %v280, %v288
          %vm290 = vcmask 253952
          %291 = vst.msk [vmem:[#allocation2] sm:$0x1] %vm290, %v289
          %v292 = vld [vmem:[#allocation2] sm:$0x1]
          %v293 = vmul.f32 %v292, 0.05
          %v294 = vsel %vm290, %v293, 0.0
          %295 = vadd.xlane.f32.xlu0 %v294
          %v296 = vpop.xlane.xlu0 %295
          %v297 = vrcp.pop 32.0
          %v298 = vmul.f32 %v296, %v297
          %v299 = vsub.f32 %v293, %v298
          %v300 = vmul.f32 %v299, %v299
          %v301 = vsel %vm290, %v300, 0.0
          %302 = vadd.xlane.f32.xlu0 %v301
          %v303 = vpop.xlane.xlu0 %302
          %v304 = vmul.f32 %v303, %v297
          %v305 = vadd.f32 %v304, 1e-06
          %v306 = vrsqrt.pop %v305
          %v307 = vmul.f32 %v299, %v306
          %v308 = vld [vmem:[%s1] sm:$0x1]
          %v309 = vmul.f32 %v307, %v308
          %v310 = vld [vmem:[%s2] sm:$0x1]
          %v311 = vadd.f32 %v309, %v310
          %v312 = vld [vmem:[%s3] sm:$0xff]
          %v313 = vld [vmem:[%s3 + $0x8] sm:$0xff]
          %v314 = vld [vmem:[%s3 + $0x10] sm:$0xff]
          %v315 = vld [vmem:[%s3 + $0x18] sm:$0xff]
          %v316 = vld [vmem:[%s4] sm:$0x1]
          %v318 = vsel %vm281, %v311, 0
          %320 = vmatprep.subr.mxu0 0.0
          %321 = vmatpush1.msra.mxu0 %v312
          %322 = vmatprep.subr.mxu0 0.0
          %323 = vmatpush1.msra.mxu0 %v313
          %324 = vmatprep.subr.mxu0 0.0
          %325 = vmatpush1.msra.mxu0 %v314
          %326 = vmatprep.subr.mxu0 0.0
          %327 = vmatpush1.msra.mxu0 %v315
          %328 = vmatprep.subr.mxu0 0.0
          %329 = vmatpush1.msra.mxu0 0.0
          %330 = vmatprep.subr.mxu0 0.0
          %331 = vmatpush1.msra.mxu0 0.0
          %332 = vmatprep.subr.mxu0 0.0
          %333 = vmatpush1.msra.mxu0 0.0
          %334 = vmatprep.subr.mxu0 0.0
          %335 = vmatpush1.msra.mxu0 0.0
          %336 = vmatprep.subr.mxu0 0.0
          %337 = vmatpush1.msra.mxu0 0.0
          %338 = vmatprep.subr.mxu0 0.0
          %339 = vmatpush1.msra.mxu0 0.0
          %340 = vmatprep.subr.mxu0 0.0
          %341 = vmatpush1.msra.mxu0 0.0
          %342 = vmatprep.subr.mxu0 0.0
          %343 = vmatpush1.msra.mxu0 0.0
          %344 = vmatprep.subr.mxu0 0.0
          %345 = vmatpush1.msra.mxu0 0.0
          %346 = vmatprep.subr.mxu0 0.0
          %347 = vmatpush1.msra.mxu0 0.0
          %348 = vmatprep.subr.mxu0 0.0
          %349 = vmatpush1.msra.mxu0 0.0
          %350 = vmatprep.subr.mxu0 0.0
          %351 = vmatpush1.msra.mxu0 0.0
          %352 = vmatprep.subr.mxu0 0.0
          %353 = vmatpush1.msra.mxu0 0.0
          %354 = vmatprep.subr.mxu0 0.0
          %355 = vmatpush1.msra.mxu0 0.0
          %356 = vmatprep.subr.mxu0 0.0
          %357 = vmatpush1.msra.mxu0 0.0
          %358 = vmatprep.subr.mxu0 0.0
          %359 = vmatpush1.msra.mxu0 0.0
          %360 = vmatprep.subr.mxu0 0.0
          %361 = vmatpush1.msra.mxu0 0.0
          %362 = vmatprep.subr.mxu0 0.0
          %363 = vmatpush1.msra.mxu0 0.0
          %364 = vmatprep.subr.mxu0 0.0
          %365 = vmatpush1.msra.mxu0 0.0
          %366 = vmatprep.subr.mxu0 0.0
          %367 = vmatpush1.msra.mxu0 0.0
          %368 = vmatprep.subr.mxu0 0.0
          %369 = vmatpush1.msra.mxu0 0.0
          %370 = vmatprep.subr.mxu0 0.0
          %371 = vmatpush1.msra.mxu0 0.0
          %372 = vmatprep.subr.mxu0 0.0
          %373 = vmatpush1.msra.mxu0 0.0
          %374 = vmatprep.subr.mxu0 0.0
          %375 = vmatpush1.msra.mxu0 0.0
          %376 = vmatprep.subr.mxu0 0.0
          %377 = vmatpush1.msra.mxu0 0.0
          %378 = vmatprep.subr.mxu0 0.0
          %379 = vmatpush1.msra.mxu0 0.0
          %380 = vmatprep.subr.mxu0 0.0
          %381 = vmatpush1.msra.mxu0 0.0
          %382 = vmatprep.subr.mxu0 0.0
          %383 = vmatpush1.msra.mxu0 0.0
          %384 = vmatprep.mubr.f32.mxu0 0.0
          %385 = vmatmul.mubr.f32.gmra.mrb[0].mxu0 %v318
          %v386 = vpop.f32.mrb[0].mxu0
          %v387 = vadd.f32 %v316, %v386
          %v388 = vpop.f32.mrb[0].mxu0
          %389 = vdwg.mxu0
          %390 = vst [vmem:[%s236] sm:$0x1] %v387
        $region52: #{tpu_custom_call.1} parent=39 // pred_fallthru
          _
        %s391 = sand.u32 %s151, 1
        %s392 = scalar_lea.sflag [#allocation4], %s391
        %s393 = sand.u32 %s151, 1
        %s394 = scalar_lea.vmem [#allocation3], %s393
        // Predicated region
        $region53: #{tpu_custom_call.1} parent=39 // pred_check
          %p395 = pneg %p161
        $region54: #{tpu_custom_call.1} parent=39 // pred_check_branch
          %397 = sbr.rel (%p395) target = $region56
        $region55: #{tpu_custom_call.1} parent=39 // pred_region
          %s399 = ssub.s32 16, 16
          %400 = vsyncadd %s392, %s399
          %s401 = smul.addr %s23, 16
          %s402 = scalar_lea.hbm %s5, %s401
          %s404 = sshll.u32 %s394, 4
          %s405 = int_to_ptr.vmem [resolvable:$true] %s404
          %407 = dma.vmem_to_hbm [thread:$0]  %s405, 16, %s402, %s392
        $region56: #{tpu_custom_call.1} parent=39 // pred_fallthru
          _
      $region40: #{tpu_custom_call.1} parent=5 // pred_fallthru
        _
      %p408 = scmp.le.s32.totalorder 2, %s14
      // Predicated region
      $region57: #{tpu_custom_call.1} parent=5 // pred_check
        %p409 = pneg %p408
      $region58: #{tpu_custom_call.1} parent=5 // pred_check_branch
        %411 = sbr.rel (%p409) target = $region60
      $region59: #{tpu_custom_call.1} parent=5 // pred_region
        %s412 = ssub.s32 %s14, 2
        // Predicated region
        $region61: #{tpu_custom_call.1} parent=59 // pred_check
          %p413 = pneg %p167
        $region62: #{tpu_custom_call.1} parent=59 // pred_check_branch
          %415 = sbr.rel (%p413) target = $region64
        $region63: #{tpu_custom_call.1} parent=59 // pred_region
          %s416 = sand.u32 %s152, 1
          %s417 = scalar_lea.sflag [#allocation4], %s416
          %s418 = sand.u32 %s152, 1
          %s419 = scalar_lea.vmem [#allocation3], %s418
          %420 = dma.done %s417, 16
        $region64: #{tpu_custom_call.1} parent=59 // pred_fallthru
          _
      $region60: #{tpu_custom_call.1} parent=5 // pred_fallthru
        _
    $region6: #{tpu_custom_call.1} parent=1 // loop_footer
      %s18 = sadd.s32 1, %s14
    $region7: #{tpu_custom_call.1} parent=1 // loop_footer_branch
      %13 = sbr.rel target = $region3
    $region8: #{tpu_custom_call.1} parent=1 // loop_exit
      _
    %421 = vsyncpa [#allocation4], 1
    %s422 = scalar_lea.sflag [#allocation4], 1
    %423 = vsyncpa %s422, 1

</llo_original>
